<compile_context>
chip_gen: v5e
topology: v5e:2x2
jax: 0.10.0
libtpu: 0.0.40
codegen_flags: <defaults>
</compile_context>

<pallas_src>
import functools

import jax
import jax.numpy as jnp
from jax import lax
from jax.experimental import pallas as pl
from jax.experimental.pallas import tpu as pltpu

KH = KW = 4
STRIDE = 2
PAD = 1
EPS = 1e-5
NEG_SLOPE = 0.2


# ----------------------------------------------------------------------------------------------
# Kernels
# ----------------------------------------------------------------------------------------------
def _fused_conv_in_lrelu_kernel(p_ref, w_ref, y_ref, sum_ref, sumsq_ref, *, p_total, tp, nt):
    """Fused conv + InstanceNorm + LeakyReLU with a VMEM-resident output block.

    p_ref:     (1, K, TP)      bf16  patches tile
    w_ref:     (CB, K)         bf16  flattened conv weight block (resident across the grid)
    y_ref:     (1, CB, P_pad)  f32   output block, resident across the spatial-tile axis
    sum_ref:   (CB, 1)         f32   scratch: running per-channel sum
    sumsq_ref: (CB, 1)         f32   scratch: running per-channel sum of squares
    """
    pt = pl.program_id(2)

    @pl.when(pt == 0)
    def _init():
        sum_ref[...] = jnp.zeros_like(sum_ref)
        sumsq_ref[...] = jnp.zeros_like(sumsq_ref)

    # Convolution as (CB, K) @ (K, TP) on the MXU with f32 accumulation.
    y = jnp.dot(w_ref[...], p_ref[0], preferred_element_type=jnp.float32)  # (CB, TP)

    if nt == 1:
        y_ref[0] = y
    else:
        off = pl.multiple_of(pt * tp, 128)  # tp is a multiple of 128 whenever nt > 1
        y_ref[0, :, pl.ds(off, tp)] = y

    sum_ref[...] += jnp.sum(y, axis=1, keepdims=True)
    sumsq_ref[...] += jnp.sum(y * y, axis=1, keepdims=True)

    @pl.when(pt == pl.num_programs(2) - 1)
    def _finalize():
        inv_p = jnp.float32(1.0 / p_total)
        mean = sum_ref[...] * inv_p                                        # (CB, 1)
        var = jnp.maximum(sumsq_ref[...] * inv_p - mean * mean, 0.0)
        rstd = lax.rsqrt(var + EPS)
        yn = (y_ref[0] - mean) * rstd                                      # (CB, P_pad)
        y_ref[0] = jnp.maximum(yn, NEG_SLOPE * yn).astype(y_ref.dtype)


def _conv_stats_kernel(p_ref, w_ref, y_ref, mean_ref, rstd_ref, *, p_total):
    """Two-phase fallback, phase 1: conv tile (bf16 intermediate) + streaming per-channel stats."""
    pt = pl.program_id(2)

    @pl.when(pt == 0)
    def _init():
        mean_ref[...] = jnp.zeros_like(mean_ref)
        rstd_ref[...] = jnp.zeros_like(rstd_ref)

    y = jnp.dot(w_ref[...], p_ref[0], preferred_element_type=jnp.float32)  # (CB, TP)
    y_ref[0] = y.astype(y_ref.dtype)                                       # bf16 intermediate
    mean_ref[0] += jnp.sum(y, axis=1, keepdims=True)
    rstd_ref[0] += jnp.sum(y * y, axis=1, keepdims=True)

    @pl.when(pt == pl.num_programs(2) - 1)
    def _finalize():
        inv_p = jnp.float32(1.0 / p_total)
        mean = mean_ref[0] * inv_p
        var = jnp.maximum(rstd_ref[0] * inv_p - mean * mean, 0.0)
        mean_ref[0] = mean
        rstd_ref[0] = lax.rsqrt(var + EPS)


def _norm_lrelu_kernel(y_ref, mean_ref, rstd_ref, o_ref):
    """Two-phase fallback, phase 2: instance-norm + LeakyReLU(0.2) on one (CB, TP) tile."""
    yn = (y_ref[0].astype(jnp.float32) - mean_ref[0]) * rstd_ref[0]
    o_ref[0] = jnp.maximum(yn, NEG_SLOPE * yn).astype(o_ref.dtype)


# ----------------------------------------------------------------------------------------------
# Host-side helpers
# ----------------------------------------------------------------------------------------------
def _im2col_kp(x):
    """x: (N, Cin, H, W) -> patches (N, K, P) with K ordered (Cin, kh, kw), P = Ho*Wo."""
    n, cin, h, w = x.shape
    ho = (h + 2 * PAD - KH) // STRIDE + 1
    wo = (w + 2 * PAD - KW) // STRIDE + 1
    xp = jnp.pad(x, ((0, 0), (0, 0), (PAD, PAD), (PAD, PAD)))
    taps = []
    for kh in range(KH):
        for kw in range(KW):
            taps.append(lax.slice(
                xp,
                (0, 0, kh, kw),
                (n, cin, kh + (ho - 1) * STRIDE + 1, kw + (wo - 1) * STRIDE + 1),
                (1, 1, STRIDE, STRIDE)))                       # (N, Cin, Ho, Wo)
    pat = jnp.stack(taps, axis=2)                              # (N, Cin, KH*KW, Ho, Wo)
    return pat.reshape(n, cin * KH * KW, ho * wo), ho, wo      # K index = ci*16 + kh*4 + kw


def _vmem_capacity_bytes():
    try:
        return int(pltpu.get_tpu_info().vmem_capacity_bytes)
    except Exception:
        return 64 * 1024 * 1024  # conservative (v7x-sized) fallback


def _pick_tp(p_dim, k_dim, vmem_cap):
    """Spatial tile TP (<= 2048 lanes, multiple of 128 when tiled) + padded spatial extent."""
    budget = max(1, int(vmem_cap * 0.25))
    tp_cap = budget // (4 * k_dim)                 # double-buffered bf16 (K, TP) patch tile
    tp = min(p_dim, 2048, max(128, tp_cap))
    if tp < p_dim:
        tp = max(128, (tp // 128) * 128)           # lane-dense tiles when tiled
    p_pad = ((p_dim + tp - 1) // tp) * tp
    return tp, p_pad


def _cout_block_options(cout):
    """Cout split factors whose block size satisfies the sublane (multiple-of-8) rule."""
    opts = [1]
    for nb in (2, 4, 8, 16):
        if cout % nb == 0 and (cout // nb) % 8 == 0:
            opts.append(nb)
    return opts


def _plan(n, cout, k_dim, tp, p_pad, vmem_cap):
    """Decide fused vs two-phase and the Cout split; all sizes counted conservatively (2x buffers)."""
    budget = int(vmem_cap * 0.7)
    patches_bytes = 2 * (k_dim * tp * 2)           # double-buffered bf16 patch tile

    opts = _cout_block_options(cout)
    fused_nb = None
    for nb in opts:
        cb = cout // nb
        fused_bytes = (patches_bytes
                       + 2 * cb * k_dim * 2        # bf16 weight block
                       + 2 * cb * p_pad * 4        # resident f32 output block
                       + 4 * cb * 4)               # stats scratch
        if fused_bytes <= budget:
            fused_nb = nb
            break
    if fused_nb is not None:
        if n * fused_nb < 2:                       # give v7x's second TensorCore some work
            for nb in opts:
                if nb >= 2:
                    fused_nb = nb
                    break
        return True, fused_nb

    for nb in opts:                                # two-phase fallback (bf16 intermediate)
        cb = cout // nb
        phase_bytes = (patches_bytes
                       + 2 * cb * k_dim * 2
                       + 2 * cb * tp * 2           # bf16 y tile
                       + 2 * cb * tp * 4           # f32 phase-2 output tile
                       + 8 * cb * 4)
        if phase_bytes <= budget:
            return False, nb
    return False, opts[-1]                         # best effort (see K-tiling TODO)


# ----------------------------------------------------------------------------------------------
# Forward
# ----------------------------------------------------------------------------------------------
@jax.jit
def unet_down(x, weight):
    """UNetDown forward. x: (N, Cin, H, W) f32, weight: (Cout, Cin, 4, 4) f32 -> (N, Cout, H//2, W//2)."""
    n, cin, h, w = x.shape
    cout = weight.shape[0]
    k_dim = cin * KH * KW

    # Cast BEFORE im2col so the 4x-expanded patches tensor is materialized in bf16.
    patches, ho, wo = _im2col_kp(x.astype(jnp.bfloat16))
    p_dim = ho * wo
    w_mat = weight.reshape(cout, k_dim).astype(jnp.bfloat16)

    vmem_cap = _vmem_capacity_bytes()
    tp, p_pad = _pick_tp(p_dim, k_dim, vmem_cap)
    if p_pad > p_dim:
        patches = jnp.pad(patches, ((0, 0), (0, 0), (0, p_pad - p_dim)))
    nt = p_pad // tp

    fused, n_cb = _plan(n, cout, k_dim, tp, p_pad, vmem_cap)
    cb = cout // n_cb
    vmem_limit = int(vmem_cap * 0.75)

    if fused:
        # Single pass: conv matmul tiles + streaming stats + in-place norm/LeakyReLU on the
        # VMEM-resident (1, cb, p_pad) output block.  No f32 intermediate round trip to HBM.
        out = pl.pallas_call(
            functools.partial(_fused_conv_in_lrelu_kernel, p_total=p_dim, tp=tp, nt=nt),
            out_shape=jax.ShapeDtypeStruct((n, cout, p_pad), jnp.float32),
            grid_spec=pltpu.PrefetchScalarGridSpec(
                num_scalar_prefetch=0,
                grid=(n, n_cb, nt),
                in_specs=[
                    pl.BlockSpec((1, k_dim, tp), lambda b, c, t: (b, 0, t)),
                    pl.BlockSpec((cb, k_dim), lambda b, c, t: (c, 0)),
                ],
                out_specs=pl.BlockSpec((1, cb, p_pad), lambda b, c, t: (b, c, 0)),
                scratch_shapes=[
                    pltpu.VMEM((cb, 1), jnp.float32),
                    pltpu.VMEM((cb, 1), jnp.float32),
                ],
            ),
            compiler_params=pltpu.CompilerParams(
                dimension_semantics=("parallel", "parallel", "arbitrary"),
                vmem_limit_bytes=vmem_limit,
            ),
        )(patches, w_mat)
    else:
        # Two-phase fallback (resident output block would not fit VMEM, e.g. huge P on v7x).
        # The intermediate is stored in bf16 to halve its HBM traffic; stats / norm math stay f32.
        y_raw, ch_mean, ch_rstd = pl.pallas_call(
            functools.partial(_conv_stats_kernel, p_total=p_dim),
            out_shape=(
                jax.ShapeDtypeStruct((n, cout, p_pad), jnp.bfloat16),
                jax.ShapeDtypeStruct((n, cout, 1), jnp.float32),
                jax.ShapeDtypeStruct((n, cout, 1), jnp.float32),
            ),
            grid_spec=pltpu.PrefetchScalarGridSpec(
                num_scalar_prefetch=0,
                grid=(n, n_cb, nt),
                in_specs=[
                    pl.BlockSpec((1, k_dim, tp), lambda b, c, t: (b, 0, t)),
                    pl.BlockSpec((cb, k_dim), lambda b, c, t: (c, 0)),
                ],
                out_specs=[
                    pl.BlockSpec((1, cb, tp), lambda b, c, t: (b, c, t)),
                    pl.BlockSpec((1, cb, 1), lambda b, c, t: (b, c, 0)),
                    pl.BlockSpec((1, cb, 1), lambda b, c, t: (b, c, 0)),
                ],
            ),
            compiler_params=pltpu.CompilerParams(
                dimension_semantics=("parallel", "parallel", "arbitrary"),
                vmem_limit_bytes=vmem_limit,
            ),
        )(patches, w_mat)

        out = pl.pallas_call(
            _norm_lrelu_kernel,
            out_shape=jax.ShapeDtypeStruct((n, cout, p_pad), jnp.float32),
            grid_spec=pltpu.PrefetchScalarGridSpec(
                num_scalar_prefetch=0,
                grid=(n, n_cb, nt),
                in_specs=[
                    pl.BlockSpec((1, cb, tp), lambda b, c, t: (b, c, t)),
                    pl.BlockSpec((1, cb, 1), lambda b, c, t: (b, c, 0)),
                    pl.BlockSpec((1, cb, 1), lambda b, c, t: (b, c, 0)),
                ],
                out_specs=pl.BlockSpec((1, cb, tp), lambda b, c, t: (b, c, t)),
            ),
            compiler_params=pltpu.CompilerParams(
                dimension_semantics=("parallel", "parallel", "parallel"),
                vmem_limit_bytes=vmem_limit,
            ),
        )(y_raw, ch_mean, ch_rstd)

    if p_pad > p_dim:
        out = out[:, :, :p_dim]
    # (N, Cout, Ho*Wo) -> NCHW is a pure metadata reshape (no transpose / extra HBM round trip).
    return out.reshape(n, cout, ho, wo)


# ----------------------------------------------------------------------------------------------
# Reference + test
# ----------------------------------------------------------------------------------------------
def _reference(x, weight):
    """Pure-JAX reference (mirrors the kernel's bf16 operand rounding; norm math in f32)."""
    xb = x.astype(jnp.bfloat16).astype(jnp.float32)
    wb = weight.astype(jnp.bfloat16).astype(jnp.float32)
    y = lax.conv_general_dilated(
        xb, wb, window_strides=(STRIDE, STRIDE), padding=((PAD, PAD), (PAD, PAD)),
        dimension_numbers=("NCHW", "OIHW", "NCHW"))
    mean = jnp.mean(y, axis=(2, 3), keepdims=True)
    var = jnp.mean((y - mean) ** 2, axis=(2, 3), keepdims=True)
    yn = (y - mean) * lax.rsqrt(var + EPS)
    return jnp.where(yn >= 0, yn, NEG_SLOPE * yn)


if __name__ == "__main__":
    key = jax.random.PRNGKey(0)
    kx, kw = jax.random.split(key)
    N, CIN, COUT, H, W = 2, 4, 8, 16, 16
    x = jax.random.normal(kx, (N, CIN, H, W), dtype=jnp.float32)
    weight = 0.05 * jax.random.normal(kw, (COUT, CIN, KH, KW), dtype=jnp.float32)

    out = jax.block_until_ready(unet_down(x, weight))
    assert out.shape == (N, COUT, H // 2, W // 2), out.shape

    ref = jax.block_until_ready(_reference(x, weight))
    max_err = float(jnp.max(jnp.abs(out - ref)))
    assert jnp.allclose(out, ref, atol=5e-3, rtol=5e-3), max_err
    print("KERNEL_OK")
</pallas_src>

<mosaic_0001>
module attributes {stable_mosaic.version = 11 : i64} {
  func.func @_fused_conv_in_lrelu_kernel(%arg0: i32, %arg1: i32, %arg2: i32, %arg3: memref<1x64x64xbf16, #tpu.memory_space<vmem>>, %arg4: memref<8x64xbf16, #tpu.memory_space<vmem>>, %arg5: memref<1x8x64xf32, #tpu.memory_space<vmem>>, %arg6: memref<8x1xf32, #tpu.memory_space<vmem>>, %arg7: memref<8x1xf32, #tpu.memory_space<vmem>>) attributes {dimension_semantics = [#tpu.dimension_semantics<parallel>, #tpu.dimension_semantics<parallel>, #tpu.dimension_semantics<arbitrary>], iteration_bounds = array<i64: 2, 1, 1>, scalar_prefetch = 0 : i64, scratch_operands = 2 : i64, tpu.core_type = #tpu.core_type<tc>, window_params = [{transform_indices = @transform_0, window_bounds = array<i64: 1, 64, 64>}, {transform_indices = @transform_1, window_bounds = array<i64: 8, 64>}, {transform_indices = @transform_2, window_bounds = array<i64: 1, 8, 64>}]} {
    %c0_i32 = arith.constant 0 : i32
    %0 = arith.cmpi eq, %arg2, %c0_i32 : i32
    %1 = arith.extui %0 : i1 to i32
    %c0_i32_0 = arith.constant 0 : i32
    %2 = arith.cmpi ne, %1, %c0_i32_0 : i32
    scf.if %2 {
      %cst_20 = arith.constant 0.000000e+00 : f32
      %24 = vector.broadcast %cst_20 : f32 to vector<8x1xf32>
      %c0_21 = arith.constant 0 : index
      %c0_22 = arith.constant 0 : index
      %25 = vector.load %arg6[%c0_21, %c0_22] : memref<8x1xf32, #tpu.memory_space<vmem>>, vector<8x1xf32>
      tpu.vector_store %arg6[%c0_21, %c0_22], %24 {strides = array<i32>} : memref<8x1xf32, #tpu.memory_space<vmem>>, vector<8x1xf32>,
      %cst_23 = arith.constant 0.000000e+00 : f32
      %26 = vector.broadcast %cst_23 : f32 to vector<8x1xf32>
      %c0_24 = arith.constant 0 : index
      %c0_25 = arith.constant 0 : index
      %27 = vector.load %arg7[%c0_24, %c0_25] : memref<8x1xf32, #tpu.memory_space<vmem>>, vector<8x1xf32>
      tpu.vector_store %arg7[%c0_24, %c0_25], %26 {strides = array<i32>} : memref<8x1xf32, #tpu.memory_space<vmem>>, vector<8x1xf32>,
    } else {
    }
    %c0 = arith.constant 0 : index
    %c0_1 = arith.constant 0 : index
    %3 = vector.load %arg4[%c0, %c0_1] : memref<8x64xbf16, #tpu.memory_space<vmem>>, vector<8x64xbf16>
    %c0_2 = arith.constant 0 : index
    %c0_3 = arith.constant 0 : index
    %c0_4 = arith.constant 0 : index
    %4 = vector.load %arg3[%c0_2, %c0_3, %c0_4] : memref<1x64x64xbf16, #tpu.memory_space<vmem>>, vector<1x64x64xbf16>
    %5 = vector.shape_cast %4 : vector<1x64x64xbf16> to vector<64x64xbf16>
    %cst = arith.constant dense<0.000000e+00> : vector<8x64xf32>
    %6 = tpu.matmul %3, %5, %cst {dimension_numbers = #tpu.dot_dimension_numbers<[1], [0], [0], [1], [0, 0, 1, 1], [], []>} : vector<8x64xbf16>, vector<64x64xbf16>, vector<8x64xf32> -> vector<8x64xf32>
    %c0_5 = arith.constant 0 : index
    %c0_6 = arith.constant 0 : index
    %c0_7 = arith.constant 0 : index
    %7 = vector.load %arg5[%c0_5, %c0_6, %c0_7] : memref<1x8x64xf32, #tpu.memory_space<vmem>>, vector<1x8x64xf32>
    %8 = vector.shape_cast %7 : vector<1x8x64xf32> to vector<8x64xf32>
    %9 = vector.shape_cast %6 : vector<8x64xf32> to vector<1x8x64xf32>
    tpu.vector_store %arg5[%c0_5, %c0_6, %c0_7], %9 {strides = array<i32>} : memref<1x8x64xf32, #tpu.memory_space<vmem>>, vector<1x8x64xf32>,
    %c0_8 = arith.constant 0 : index
    %c0_9 = arith.constant 0 : index
    %10 = vector.load %arg6[%c0_8, %c0_9] : memref<8x1xf32, #tpu.memory_space<vmem>>, vector<8x1xf32>
    %cst_10 = arith.constant dense<0.000000e+00> : vector<8xf32>
    %11 = vector.multi_reduction <add>, %6, %cst_10 [1] : vector<8x64xf32> to vector<8xf32>
    %12 = vector.shape_cast %11 : vector<8xf32> to vector<8x1xf32>
    %13 = arith.addf %10, %12 : vector<8x1xf32>
    %c0_11 = arith.constant 0 : index
    %c0_12 = arith.constant 0 : index
    %14 = vector.load %arg6[%c0_11, %c0_12] : memref<8x1xf32, #tpu.memory_space<vmem>>, vector<8x1xf32>
    tpu.vector_store %arg6[%c0_11, %c0_12], %13 {strides = array<i32>} : memref<8x1xf32, #tpu.memory_space<vmem>>, vector<8x1xf32>,
    %c0_13 = arith.constant 0 : index
    %c0_14 = arith.constant 0 : index
    %15 = vector.load %arg7[%c0_13, %c0_14] : memref<8x1xf32, #tpu.memory_space<vmem>>, vector<8x1xf32>
    %16 = arith.mulf %6, %6 : vector<8x64xf32>
    %cst_15 = arith.constant dense<0.000000e+00> : vector<8xf32>
    %17 = vector.multi_reduction <add>, %16, %cst_15 [1] : vector<8x64xf32> to vector<8xf32>
    %18 = vector.shape_cast %17 : vector<8xf32> to vector<8x1xf32>
    %19 = arith.addf %15, %18 : vector<8x1xf32>
    %c0_16 = arith.constant 0 : index
    %c0_17 = arith.constant 0 : index
    %20 = vector.load %arg7[%c0_16, %c0_17] : memref<8x1xf32, #tpu.memory_space<vmem>>, vector<8x1xf32>
    tpu.vector_store %arg7[%c0_16, %c0_17], %19 {strides = array<i32>} : memref<8x1xf32, #tpu.memory_space<vmem>>, vector<8x1xf32>,
    %c0_i32_18 = arith.constant 0 : i32
    %21 = arith.cmpi eq, %arg2, %c0_i32_18 : i32
    %22 = arith.extui %21 : i1 to i32
    %c0_i32_19 = arith.constant 0 : i32
    %23 = arith.cmpi ne, %22, %c0_i32_19 : i32
    scf.if %23 {
      %c0_20 = arith.constant 0 : index
      %c0_21 = arith.constant 0 : index
      %24 = vector.load %arg6[%c0_20, %c0_21] : memref<8x1xf32, #tpu.memory_space<vmem>>, vector<8x1xf32>
      %cst_22 = arith.constant 1.562500e-02 : f32
      %25 = vector.broadcast %cst_22 : f32 to vector<8x1xf32>
      %26 = arith.mulf %24, %25 : vector<8x1xf32>
      %c0_23 = arith.constant 0 : index
      %c0_24 = arith.constant 0 : index
      %27 = vector.load %arg7[%c0_23, %c0_24] : memref<8x1xf32, #tpu.memory_space<vmem>>, vector<8x1xf32>
      %cst_25 = arith.constant 1.562500e-02 : f32
      %28 = vector.broadcast %cst_25 : f32 to vector<8x1xf32>
      %29 = arith.mulf %27, %28 : vector<8x1xf32>
      %30 = arith.mulf %26, %26 : vector<8x1xf32>
      %31 = arith.subf %29, %30 : vector<8x1xf32>
      %cst_26 = arith.constant 0.000000e+00 : f32
      %32 = vector.broadcast %cst_26 : f32 to vector<8x1xf32>
      %33 = arith.maximumf %31, %32 : vector<8x1xf32>
      %cst_27 = arith.constant 9.99999974E-6 : f32
      %34 = vector.broadcast %cst_27 : f32 to vector<8x1xf32>
      %35 = arith.addf %33, %34 : vector<8x1xf32>
      %36 = math.rsqrt %35 : vector<8x1xf32>
      %c0_28 = arith.constant 0 : index
      %c0_29 = arith.constant 0 : index
      %c0_30 = arith.constant 0 : index
      %37 = vector.load %arg5[%c0_28, %c0_29, %c0_30] : memref<1x8x64xf32, #tpu.memory_space<vmem>>, vector<1x8x64xf32>
      %38 = vector.shape_cast %37 : vector<1x8x64xf32> to vector<8x64xf32>
      %39 = vector.broadcast %26 : vector<8x1xf32> to vector<8x64xf32>
      %40 = arith.subf %38, %39 : vector<8x64xf32>
      %41 = vector.broadcast %36 : vector<8x1xf32> to vector<8x64xf32>
      %42 = arith.mulf %40, %41 : vector<8x64xf32>
      %cst_31 = arith.constant 2.000000e-01 : f32
      %43 = vector.broadcast %cst_31 : f32 to vector<8x64xf32>
      %44 = arith.mulf %43, %42 : vector<8x64xf32>
      %45 = arith.maximumf %42, %44 : vector<8x64xf32>
      %c0_32 = arith.constant 0 : index
      %c0_33 = arith.constant 0 : index
      %c0_34 = arith.constant 0 : index
      %46 = vector.load %arg5[%c0_32, %c0_33, %c0_34] : memref<1x8x64xf32, #tpu.memory_space<vmem>>, vector<1x8x64xf32>
      %47 = vector.shape_cast %46 : vector<1x8x64xf32> to vector<8x64xf32>
      %48 = vector.shape_cast %45 : vector<8x64xf32> to vector<1x8x64xf32>
      tpu.vector_store %arg5[%c0_32, %c0_33, %c0_34], %48 {strides = array<i32>} : memref<1x8x64xf32, #tpu.memory_space<vmem>>, vector<1x8x64xf32>,
    } else {
    }
    return
  }
  func.func @transform_0(%arg0: i32, %arg1: i32, %arg2: i32) -> (i32, i32, i32) {
    %c0_i32 = arith.constant 0 : i32
    %c0_i32_0 = arith.constant 0 : i32
    return %arg0, %c0_i32, %arg2 : i32, i32, i32
  }
  func.func @transform_1(%arg0: i32, %arg1: i32, %arg2: i32) -> (i32, i32) {
    %c0_i32 = arith.constant 0 : i32
    %c0_i32_0 = arith.constant 0 : i32
    return %arg1, %c0_i32 : i32, i32
  }
  func.func @transform_2(%arg0: i32, %arg1: i32, %arg2: i32) -> (i32, i32, i32) {
    %c0_i32 = arith.constant 0 : i32
    %c0_i32_0 = arith.constant 0 : i32
    return %arg0, %arg1, %c0_i32 : i32, i32, i32
  }
}

</mosaic_0001>

<llo_original>
// kernel: unet_down.1
$region0: #{unet_down.1}
  #allocation0 [shape = 'u32[]', space=smem, size = 0x4, offset = 0x4, fixed_abs, tag = 'smem constant byte address 0x4 - core index']
  #allocation1 [shape = 'u32[72,128]{1,0:T(1,128)}', space=vmem, size = 0x9000, scoped, tag = 'internal scratch']
  #allocation2 [shape = 'f32[8,1]{1,0:T(8,128)}', space=vmem, size = 0x1000, scoped, tag = 'scratch operand']
  #allocation3 [shape = 'f32[8,1]{1,0:T(8,128)}', space=vmem, size = 0x1000, scoped, tag = 'scratch operand']
  %s0 = inlined_call_operand.vmem [shape: bf16[2,64,64], index: 0, kind: input, shape index: {}]
  %s1 = inlined_call_operand.vmem [shape: bf16[8,64], index: 1, kind: input, shape index: {}]
  %s2 = inlined_call_operand.vmem [shape: f32[2,8,64], index: 2, kind: output, shape index: {}]
  %s3 = sld [smem:[#allocation0]]
  $region49: #{unet_down.1} parent=0
    _
  %s5 = ssub.s32 1, %s3
  %s6 = scalar_select 0, %s5, %s3
  loop: start=0, step=1, limit=4
  $region2: #{unet_down.1} parent=0 // loop_pre_header
    _
  $region3: #{unet_down.1} parent=0 // loop_header
    %s8 = sphi 0, %s12
    %p9 = scmp.ge.s32.totalorder %s8, 4
    %s15 = sphi 0, %s34
    %s16 = sphi 0, %s30
    %s17 = sphi 0, %s26
    %s18 = sphi 0, %s15
    %s19 = sphi 0, %s16
    %s20 = sphi 0, %s17
    %s21 = sphi 0, %s18
    %s22 = sphi 0, %s19
    %s23 = sphi 0, %s20
    %s39 = sphi 0, %s41
    %s42 = sphi 0, %s39
    %s43 = sphi 0, %s42
    %s59 = sphi 0, %s43
    %s65 = sphi 0, %s67
    %s68 = sphi 0, %s65
    %s69 = sphi 0, %s68
    %s85 = sphi 0, %s69
    %s93 = sphi 0, %s95
    %s96 = sphi 0, %s93
    %s97 = sphi 0, %s96
    %s113 = sphi 0, %s97
  $region4: #{unet_down.1} parent=0 // loop_header_branch
    %11 = sbr.rel (%p9) target = $region8
  $region5: #{unet_down.1} parent=0 // loop_body
    %s13 = ssub.s32 %s8, 1
    %s14 = ssub.s32 %s8, 2
    %s24 = sadd.s32 1, %s17
    %p25 = scmp.ge.s32.totalorder %s24, 1
    %s26 = scalar_select %p25, 0, %s24
    %s27 = sadd.s32 1, %s16
    %s28 = scalar_select %p25, %s27, %s16
    %p29 = scmp.ge.s32.totalorder %s28, 1
    %s30 = scalar_select %p29, 0, %s28
    %s31 = sadd.s32 1, %s15
    %s32 = scalar_select %p29, %s31, %s15
    %p33 = scmp.ge.s32.totalorder %s32, 2
    %s34 = scalar_select %p33, 0, %s32
    %s35 = ssub.s32 %s15, %s34
    %s36 = ssub.s32 %s17, %s26
    %s37 = sor.u32 %s35, %s36
    %p38 = scmp.eq.s32.totalorder %s37, 0
    %s40 = sadd.s32 %s39, 1
    %s41 = scalar_select %p38, %s39, %s40
    %p44 = pneg %p38
    %p45 = scmp.eq.s32.totalorder %s8, 1
    %p46 = por %p44, %p45
    %p47 = scmp.ne.s32.totalorder %s39, %s42
    %p48 = scmp.eq.s32.totalorder %s8, 0
    %p49 = por %p47, %p48
    %p50 = scmp.ne.s32.totalorder %s39, %s42
    %p51 = scmp.eq.s32.totalorder %s13, 1
    %p52 = por %p50, %p51
    %p53 = scmp.ne.s32.totalorder %s42, %s43
    %p54 = scmp.eq.s32.totalorder %s13, 0
    %p55 = por %p53, %p54
    %p56 = scmp.ne.s32.totalorder %s42, %s43
    %p57 = scmp.eq.s32.totalorder %s14, 1
    %p58 = por %p56, %p57
    %p60 = scmp.ne.s32.totalorder %s43, %s59
    %p61 = scmp.eq.s32.totalorder %s14, 0
    %p62 = por %p60, %p61
    %s63 = ssub.s32 %s16, %s30
    %p64 = scmp.eq.s32.totalorder %s63, 0
    %s66 = sadd.s32 %s65, 1
    %s67 = scalar_select %p64, %s65, %s66
    %p70 = pneg %p64
    %p71 = scmp.eq.s32.totalorder %s8, 1
    %p72 = por %p70, %p71
    %p73 = scmp.ne.s32.totalorder %s65, %s68
    %p74 = scmp.eq.s32.totalorder %s8, 0
    %p75 = por %p73, %p74
    %p76 = scmp.ne.s32.totalorder %s65, %s68
    %p77 = scmp.eq.s32.totalorder %s13, 1
    %p78 = por %p76, %p77
    %p79 = scmp.ne.s32.totalorder %s68, %s69
    %p80 = scmp.eq.s32.totalorder %s13, 0
    %p81 = por %p79, %p80
    %p82 = scmp.ne.s32.totalorder %s68, %s69
    %p83 = scmp.eq.s32.totalorder %s14, 1
    %p84 = por %p82, %p83
    %p86 = scmp.ne.s32.totalorder %s69, %s85
    %p87 = scmp.eq.s32.totalorder %s14, 0
    %p88 = por %p86, %p87
    %s89 = ssub.s32 %s15, %s34
    %s90 = ssub.s32 %s16, %s30
    %s91 = sor.u32 %s89, %s90
    %p92 = scmp.eq.s32.totalorder %s91, 0
    %s94 = sadd.s32 %s93, 1
    %s95 = scalar_select %p92, %s93, %s94
    %p98 = pneg %p92
    %p99 = scmp.eq.s32.totalorder %s8, 1
    %p100 = por %p98, %p99
    %p101 = scmp.ne.s32.totalorder %s93, %s96
    %p102 = scmp.eq.s32.totalorder %s8, 0
    %p103 = por %p101, %p102
    %p104 = scmp.ne.s32.totalorder %s93, %s96
    %p105 = scmp.eq.s32.totalorder %s13, 1
    %p106 = por %p104, %p105
    %p107 = scmp.ne.s32.totalorder %s96, %s97
    %p108 = scmp.eq.s32.totalorder %s13, 0
    %p109 = por %p107, %p108
    %p110 = scmp.ne.s32.totalorder %s96, %s97
    %p111 = scmp.eq.s32.totalorder %s14, 1
    %p112 = por %p110, %p111
    %p114 = scmp.ne.s32.totalorder %s97, %s113
    %p115 = scmp.eq.s32.totalorder %s14, 0
    %p116 = por %p114, %p115
    %p117 = scmp.le.s32.totalorder 1, %s8
    %p118 = scmp.lt.s32.totalorder %s8, 3
    %p119 = pnand %p117, %p118
    %p120 = pneg %p119
    // Predicated region
    $region9: #{unet_down.1} parent=5 // pred_check
      _
    $region10: #{unet_down.1} parent=5 // pred_check_branch
      %122 = sbr.rel (%p119) target = $region12
    $region11: #{unet_down.1} parent=5 // pred_region
      %s123 = ssub.s32 %s8, 1
      // Predicated region
      $region13: #{unet_down.1} parent=11 // pred_check
        %p124 = pneg %p81
      $region14: #{unet_down.1} parent=11 // pred_check_branch
        %126 = sbr.rel (%p124) target = $region16
      $region15: #{unet_down.1} parent=11 // pred_region
        %p127 = scmp.lt.s32.totalorder %s19, 0
        %s128 = scalar_select %p127, %s19, 0
        %s129 = smul.addr %s128, 4
        %s130 = scalar_lea.vmem %s1, %s129
      $region16: #{unet_down.1} parent=11 // pred_fallthru
        _
    $region12: #{unet_down.1} parent=5 // pred_fallthru
      _
    %p131 = scmp.lt.s32.totalorder %s8, 2
    // Predicated region
    $region17: #{unet_down.1} parent=5 // pred_check
      %p132 = pneg %p131
    $region18: #{unet_down.1} parent=5 // pred_check_branch
      %134 = sbr.rel (%p132) target = $region20
    $region19: #{unet_down.1} parent=5 // pred_region
      // Predicated region
      $region21: #{unet_down.1} parent=19 // pred_check
        %p135 = pneg %p49
      $region22: #{unet_down.1} parent=19 // pred_check_branch
        %137 = sbr.rel (%p135) target = $region24
      $region23: #{unet_down.1} parent=19 // pred_region
        %p138 = scmp.lt.s32.totalorder %s15, 1
        %s139 = scalar_select %p138, %s15, 1
        %p140 = scmp.lt.s32.totalorder %s17, 0
        %s141 = scalar_select %p140, %s17, 0
        %s142 = smul.addr %s139, 8
        %s143 = sadd.s32 %s141, %s142
        %s144 = smul.addr %s143, 4
        %s145 = scalar_lea.vmem %s0, %s144
      $region24: #{unet_down.1} parent=19 // pred_fallthru
        _
    $region20: #{unet_down.1} parent=5 // pred_fallthru
      _
    %p146 = scmp.le.s32.totalorder 1, %s8
    %p147 = scmp.lt.s32.totalorder %s8, 3
    %p148 = pnand %p146, %p147
    %p149 = pneg %p148
    // Predicated region
    $region25: #{unet_down.1} parent=5 // pred_check
      _
    $region26: #{unet_down.1} parent=5 // pred_check_branch
      %151 = sbr.rel (%p148) target = $region28
    $region27: #{unet_down.1} parent=5 // pred_region
      %s152 = ssub.s32 %s8, 1
      %p153 = scmp.lt.s32.totalorder %s18, 1
      %s154 = scalar_select %p153, %s18, 1
      %p155 = scmp.lt.s32.totalorder %s20, 0
      %s156 = scalar_select %p155, %s20, 0
      %s157 = smul.addr %s154, 8
      %s158 = sadd.s32 %s156, %s157
      %s159 = smul.addr %s158, 4
      %s160 = scalar_lea.vmem %s0, %s159
      %p161 = pneg %p55
      %p162 = pneg %p52
      %p163 = scmp.lt.s32.totalorder %s19, 0
      %s164 = scalar_select %p163, %s19, 0
      %s165 = smul.addr %s164, 4
      %s166 = scalar_lea.vmem %s1, %s165
      %p167 = pneg %p81
      %p168 = pneg %p78
      %p169 = pneg %p109
      %p170 = pneg %p106
      %p171 = scmp.lt.s32.totalorder %s18, 1
      %s172 = scalar_select %p171, %s18, 1
      %p173 = scmp.lt.s32.totalorder %s19, 0
      %s174 = scalar_select %p173, %s19, 0
      %s175 = sadd.s32 %s174, %s172
      %s176 = smul.addr %s175, 8
      %s177 = scalar_lea.vmem %s2, %s176
      %p178 = scmp.lt.s32.totalorder %s18, 1
      %s179 = scalar_select %p178, %s18, 1
      %p180 = scmp.lt.s32.totalorder %s20, 0
      %s181 = scalar_select %p180, %s20, 0
      %s182 = smul.addr %s179, 8
      %s183 = sadd.s32 %s181, %s182
      %s184 = smul.addr %s183, 4
      %s185 = scalar_lea.vmem %s0, %s184
      %p186 = scmp.lt.s32.totalorder %s19, 0
      %s187 = scalar_select %p186, %s19, 0
      %s188 = smul.addr %s187, 4
      %s189 = scalar_lea.vmem %s1, %s188
      %p190 = scmp.lt.s32.totalorder %s18, 1
      %s191 = scalar_select %p190, %s18, 1
      %p192 = scmp.lt.s32.totalorder %s19, 0
      %s193 = scalar_select %p192, %s19, 0
      %s194 = sadd.s32 %s193, %s191
      %s195 = smul.addr %s194, 8
      %s196 = scalar_lea.vmem %s2, %s195
      %p198 = scmp.eq.s32.totalorder %s20, 0
      // Predicated region
      $region29: #{unet_down.1} parent=27 // pred_check
        %p199 = pneg %p198
      $region30: #{unet_down.1} parent=27 // pred_check_branch
        %201 = sbr.rel (%p199) target = $region32
      $region31: #{unet_down.1} parent=27 // pred_region
        %vm202 = vcmask 7168
        %203 = vst.msk [vmem:[#allocation2] sm:$0xff] %vm202, 0.0
        %204 = vst.msk [vmem:[#allocation3] sm:$0xff] %vm202, 0.0
      $region32: #{unet_down.1} parent=27 // pred_fallthru
        _
      %v205 = vld [vmem:[%s189] sm:$0xf]
      %v206 = vld [vmem:[%s185] sm:$0xf]
      %v207 = vld [vmem:[%s185 + $0x4] sm:$0xf]
      %v208 = vld [vmem:[%s185 + $0x8] sm:$0xf]
      %v209 = vld [vmem:[%s185 + $0xc] sm:$0xf]
      %v210 = vld [vmem:[%s185 + $0x10] sm:$0xf]
      %v211 = vld [vmem:[%s185 + $0x14] sm:$0xf]
      %v212 = vld [vmem:[%s185 + $0x18] sm:$0xf]
      %v213 = vld [vmem:[%s185 + $0x1c] sm:$0xf]
      %v222 = vunpack.c.l.b16 %v206
      %v223 = vunpack.c.l.b16 %v207
      %v224 = vunpack.c.l.b16 %v208
      %v225 = vunpack.c.l.b16 %v209
      %v226 = vunpack.c.l.b16 %v210
      %v227 = vunpack.c.l.b16 %v211
      %v228 = vunpack.c.l.b16 %v212
      %v229 = vunpack.c.l.b16 %v213
      %v230 = vpack.c.b16 %v223, %v222
      %v231 = vpack.c.b16 %v225, %v224
      %v232 = vpack.c.b16 %v227, %v226
      %v233 = vpack.c.b16 %v229, %v228
      %vm238 = vcmask 523264
      %v240 = vsel %vm238, %v205, 0
      %242 = vmatpush.bf16.msra.mxu0 0
      %243 = vmatpush.bf16.msra.mxu0 0
      %244 = vmatpush.bf16.msra.mxu0 0
      %245 = vmatpush.bf16.msra.mxu0 0
      %246 = vmatpush.bf16.msra.mxu0 %v233
      %247 = vmatpush.bf16.msra.mxu0 %v232
      %248 = vmatpush.bf16.msra.mxu0 %v231
      %249 = vmatpush.bf16.msra.mxu0 %v230
      %250 = vmatmul.bf16.gmra.mxu0 %v240
      %v251 = vpop.f32.mrf.mxu0
      %v252 = vadd.f32 0.0, %v251
      %v253 = vpop.f32.mrf.mxu0
      %254 = vdwg.mxu0
      %255 = vst.msk [vmem:[%s196] sm:$0xff] %vm238, %v252
      %v256 = vld [vmem:[#allocation2] sm:$0xff]
      %v257 = vsel %vm238, %v252, 0.0
      %258 = vadd.xlane.f32.xlu0 %v257
      %v259 = vpop.xlane.xlu0 %258
      %v260 = vadd.f32 %v256, %v259
      %vm261 = vcmask 7168
      %262 = vst.msk [vmem:[#allocation2] sm:$0xff] %vm261, %v260
      %v263 = vld [vmem:[#allocation3] sm:$0xff]
      %v264 = vmul.f32 %v252, %v252
      %v265 = vsel %vm238, %v264, 0.0
      %266 = vadd.xlane.f32.xlu0 %v265
      %v267 = vpop.xlane.xlu0 %266
      %v268 = vadd.f32 %v263, %v267
      %269 = vst.msk [vmem:[#allocation3] sm:$0xff] %vm261, %v268
      // Predicated region
      $region33: #{unet_down.1} parent=27 // pred_check
        %p270 = pneg %p198
      $region34: #{unet_down.1} parent=27 // pred_check_branch
        %272 = sbr.rel (%p270) target = $region36
      $region35: #{unet_down.1} parent=27 // pred_region
        %v273 = vld [vmem:[#allocation2] sm:$0xff]
        %v274 = vmul.f32 %v273, 0.015625
        %v275 = vld [vmem:[#allocation3] sm:$0xff]
        %v276 = vmul.f32 %v275, 0.015625
        %v277 = vmul.f32 %v274, %v274
        %v278 = vsub.f32 %v276, %v277
        %v279 = vmax.f32 %v278, 0.0
        %v280 = vadd.f32 %v279, 1e-05
        %v281 = vrsqrt.pop %v280
        %v282 = vmul.f32 %v281, %v280
        %v283 = vmul.f32 %v282, %v281
        %v284 = vmul.f32 0.5, %v283
        %v285 = vsub.f32 1.5, %v284
        %v286 = vmul.f32 %v281, %v285
        %vm287 = vweird.f32 %v280
        %vm288 = vweird.f32 %v281
        %vm289 = vmor %vm287, %vm288
        %v290 = vsel %vm289, %v281, %v286
        %v291 = vld [vmem:[%s196] sm:$0xff]
        %293 = vset.pattern.permute.xlu0 0
        %294 = vperm.xlu0 %293, %v274
        %v295 = vpop.permute.xlu0 %294
        %v297 = vsub.f32 %v291, %v295
        %299 = vset.pattern.permute.xlu0 0
        %300 = vperm.xlu0 %299, %v290
        %v301 = vpop.permute.xlu0 %300
        %v303 = vmul.f32 %v297, %v301
        %v304 = vmul.f32 %v303, 0.2
        %v305 = vmax.f32 %v303, %v304
        %306 = vst.msk [vmem:[%s196] sm:$0xff] %vm238, %v305
      $region36: #{unet_down.1} parent=27 // pred_fallthru
        _
      %p307 = scmp.lt.s32.totalorder %s18, 1
      %s308 = scalar_select %p307, %s18, 1
      %p309 = scmp.lt.s32.totalorder %s19, 0
      %s310 = scalar_select %p309, %s19, 0
      %s311 = sadd.s32 %s310, %s308
      %s312 = smul.addr %s311, 8
      %s313 = scalar_lea.vmem %s2, %s312
      // Predicated region
      $region37: #{unet_down.1} parent=27 // pred_check
        %p314 = pneg %p106
      $region38: #{unet_down.1} parent=27 // pred_check_branch
        %316 = sbr.rel (%p314) target = $region40
      $region39: #{unet_down.1} parent=27 // pred_region
        _
      $region40: #{unet_down.1} parent=27 // pred_fallthru
        _
    $region28: #{unet_down.1} parent=5 // pred_fallthru
      _
    %p317 = scmp.le.s32.totalorder 2, %s8
    // Predicated region
    $region41: #{unet_down.1} parent=5 // pred_check
      %p318 = pneg %p317
    $region42: #{unet_down.1} parent=5 // pred_check_branch
      %320 = sbr.rel (%p318) target = $region44
    $region43: #{unet_down.1} parent=5 // pred_region
      %s321 = ssub.s32 %s8, 2
      // Predicated region
      $region45: #{unet_down.1} parent=43 // pred_check
        %p322 = pneg %p112
      $region46: #{unet_down.1} parent=43 // pred_check_branch
        %324 = sbr.rel (%p322) target = $region48
      $region47: #{unet_down.1} parent=43 // pred_region
        %p325 = scmp.lt.s32.totalorder %s21, 1
        %s326 = scalar_select %p325, %s21, 1
        %p327 = scmp.lt.s32.totalorder %s22, 0
        %s328 = scalar_select %p327, %s22, 0
        %s329 = sadd.s32 %s328, %s326
        %s330 = smul.addr %s329, 8
        %s331 = scalar_lea.vmem %s2, %s330
      $region48: #{unet_down.1} parent=43 // pred_fallthru
        _
    $region44: #{unet_down.1} parent=5 // pred_fallthru
      _
  $region6: #{unet_down.1} parent=0 // loop_footer
    %s12 = sadd.s32 1, %s8
  $region7: #{unet_down.1} parent=0 // loop_footer_branch
    %7 = sbr.rel target = $region3
  $region8: #{unet_down.1} parent=0 // loop_exit
    _

</llo_original>
